<compile_context>
chip_gen: v5e
topology: v5e:2x2
jax: 0.10.0
libtpu: 0.0.40
codegen_flags: <defaults>
</compile_context>

<pallas_src>
import functools

import jax
import jax.numpy as jnp
from jax.experimental import pallas as pl
from jax.experimental.pallas import tpu as pltpu

HIDDEN = 128


def _round_up(x, m):
    return ((x + m - 1) // m) * m


def _choose_batch_tile(B, *, max_tb=8192, min_tiles=4, step_floor=1024):
    """Pick the batch tile.

    * tiny batches (RL rollout sizes): a single small tile;
    * moderate batches: at least `min_tiles` grid steps so the v7x megacore
      "parallel" axis gives each TensorCore >=2 tiles;
    * large batches: cap at `max_tb` rows; the dominant VMEM terms are the
      (tb,128) f32 hidden temp (tb*512 B) and the double-buffered f32 obs
      tile, which at 8192 rows total well under the v7x 64 MiB VMEM.
    `step_floor` keeps per-step DMA large enough to amortize the ~0.35 us
    fixed per-grid-step overhead.
    """
    tb_full = _round_up(B, 16)
    if tb_full <= step_floor:
        return min(tb_full, max_tb)
    tb = _round_up(pl.cdiv(B, min_tiles), 16)
    return max(step_floor, min(tb, max_tb))


def _critic_kernel(obs_ref, w1_ref, b1_ref, w2_ref, b2_ref, out_ref, *, matmul_dtype):
    # Cast to the MXU dtype *inside* the kernel (VPU work hidden under the
    # obs-tile DMA / MXU) rather than as a standalone XLA convert over HBM.
    x = obs_ref[...].astype(matmul_dtype)
    w1 = w1_ref[...].astype(matmul_dtype)
    # Layer 1 on the MXU: (TB, D) @ (D, 128), f32 accumulation.
    h = jnp.dot(x, w1, preferred_element_type=jnp.float32)
    h = jnp.maximum(h + b1_ref[...], 0.0)                    # bias + ReLU (f32, VPU)
    # Layer 2 has out_features == 1: a (128, 1) RHS would use 1/128 of the MXU
    # columns, so do it as a broadcast multiply (VPU) + lane reduction (XLU).
    v = jnp.sum(h * w2_ref[...], axis=-1, keepdims=True)     # (TB, 1)
    out_ref[...] = (v + b2_ref[0, 0]).astype(out_ref.dtype)


def critic_forward(global_obs, params, *, block_b=8192, matmul_dtype=jnp.bfloat16):
    """Fused Critic forward: value = relu(obs @ W1 + b1) @ W2 + b2."""
    B, D = global_obs.shape

    tb = _choose_batch_tile(B, max_tb=block_b)
    grid = (pl.cdiv(B, tb),)

    # Tiny parameter reshapes only; obs is passed untouched (no pad / astype).
    b1 = params["b1"].astype(jnp.float32)                          # (1, 128)
    w2_row = params["w2"].reshape(1, HIDDEN).astype(jnp.float32)   # (1, 128)
    b2 = params["b2"].reshape(1, 1).astype(jnp.float32)            # scalar -> SMEM

    obs_bytes = B * D * jnp.dtype(global_obs.dtype).itemsize
    cost = pl.CostEstimate(
        flops=2 * B * D * HIDDEN + 4 * B * HIDDEN,
        transcendentals=0,
        bytes_accessed=obs_bytes + (D * HIDDEN + 2 * HIDDEN + 1 + B) * 4,
    )

    # VMEM budget: double-buffered obs/out tiles + f32 hidden temps + bf16
    # casts + weights.  2x headroom, clamped to 48 MiB (safe on v7x 64 MiB).
    est_vmem = (
        2 * tb * D * 4                         # obs tile, double-buffered (f32)
        + 2 * tb * 4                           # out tile, double-buffered
        + 2 * tb * HIDDEN * 4                  # hidden activation + h*w2 temps
        + tb * (D + HIDDEN) * 2                # in-kernel bf16 copies
        + 2 * (D * HIDDEN + 3 * HIDDEN) * 4    # weights / biases
    )
    vmem_limit = int(min(max(2 * est_vmem, 16 * 1024 * 1024), 48 * 1024 * 1024))

    out = pl.pallas_call(
        functools.partial(_critic_kernel, matmul_dtype=matmul_dtype),
        out_shape=jax.ShapeDtypeStruct((B, 1), jnp.float32),
        grid=grid,
        in_specs=[
            # Observations: tiled over the batch, double-buffer pipelined.
            # Last (ragged) block: rows are independent and OOB output rows
            # are never written back, so the tail needs no explicit padding.
            pl.BlockSpec((tb, D), lambda i: (i, 0)),
            # Weights / biases: constant index_map -> fetched once, VMEM-resident.
            pl.BlockSpec((D, HIDDEN), lambda i: (0, 0)),
            pl.BlockSpec((1, HIDDEN), lambda i: (0, 0)),
            pl.BlockSpec((1, HIDDEN), lambda i: (0, 0)),
            # Scalar output bias lives in SMEM.
            pl.BlockSpec(memory_space=pltpu.MemorySpace.SMEM),
        ],
        out_specs=pl.BlockSpec((tb, 1), lambda i: (i, 0)),
        compiler_params=pltpu.CompilerParams(
            dimension_semantics=("parallel",),
            vmem_limit_bytes=vmem_limit,
        ),
        cost_estimate=cost,
    )(global_obs, params["w1"], b1, w2_row, b2)

    return out


def init_params(key, input_size):
    """Deterministic init; shapes mirror nn.Linear (stored transposed: [in, out])."""
    ks = jax.random.split(key, 4)

    def lin(kw, kb, fan_in, fan_out):
        # PyTorch default Linear init: U(-1/sqrt(fan_in), 1/sqrt(fan_in))
        bound = 1.0 / (fan_in ** 0.5)
        w = jax.random.uniform(kw, (fan_in, fan_out), jnp.float32, -bound, bound)
        b = jax.random.uniform(kb, (1, fan_out), jnp.float32, -bound, bound)
        return w, b

    w1, b1 = lin(ks[0], ks[1], input_size, HIDDEN)
    w2, b2 = lin(ks[2], ks[3], HIDDEN, 1)
    return dict(w1=w1, b1=b1, w2=w2, b2=b2)


def _reference_forward(global_obs, params, matmul_dtype=jnp.float32):
    """Pure-JAX reference (optionally with the same bf16 matmul-operand cast)."""
    x = global_obs.astype(matmul_dtype)
    w1 = params["w1"].astype(matmul_dtype)
    h = jnp.maximum(
        jnp.dot(x, w1, preferred_element_type=jnp.float32) + params["b1"], 0.0)
    return h @ params["w2"] + params["b2"]


if __name__ == "__main__":
    key = jax.random.PRNGKey(0)
    k_obs, k_obs2, k_params = jax.random.split(key, 3)

    input_size = 32          # global-observation dim
    params = init_params(k_params, input_size)

    # Small batch (mirrors the RL usage): single small ragged tile.
    B = 2
    global_obs = jax.random.normal(k_obs, (B, input_size), jnp.float32)
    value = critic_forward(global_obs, params)
    jax.block_until_ready(value)
    assert value.shape == (B, 1)

    ref_bf16 = _reference_forward(global_obs, params, jnp.bfloat16)
    ref_f32 = _reference_forward(global_obs, params, jnp.float32)
    assert jnp.allclose(value, ref_bf16, atol=1e-4, rtol=1e-4)
    assert jnp.allclose(value, ref_f32, atol=5e-2, rtol=5e-2)

    # Larger batch: exercises multiple grid steps plus the ragged last block
    # (no wrapper-side padding or slicing involved).
    B2 = 4100
    global_obs2 = jax.random.normal(k_obs2, (B2, input_size), jnp.float32)
    value2 = critic_forward(global_obs2, params)
    jax.block_until_ready(value2)
    assert value2.shape == (B2, 1)
    ref2 = _reference_forward(global_obs2, params, jnp.bfloat16)
    assert jnp.allclose(value2, ref2, atol=1e-4, rtol=1e-4)

    print("KERNEL_OK")
</pallas_src>

<mosaic_0001>
module attributes {stable_mosaic.version = 11 : i64} {
  func.func @_critic_kernel(%arg0: i32, %arg1: memref<16x32xf32, #tpu.memory_space<vmem>>, %arg2: memref<32x128xf32, #tpu.memory_space<vmem>>, %arg3: memref<1x128xf32, #tpu.memory_space<vmem>>, %arg4: memref<1x128xf32, #tpu.memory_space<vmem>>, %arg5: memref<1x1xf32, #tpu.memory_space<smem>>, %arg6: memref<16x1xf32, #tpu.memory_space<vmem>>) attributes {dimension_semantics = [#tpu.dimension_semantics<parallel>], iteration_bounds = array<i64: 1>, scalar_prefetch = 0 : i64, scratch_operands = 0 : i64, tpu.core_type = #tpu.core_type<tc>, window_params = [{transform_indices = @transform_0, window_bounds = array<i64: 16, 32>}, {pipeline_mode = #tpu.pipeline_mode<synchronous>, transform_indices = @transform_1, window_bounds = array<i64: 32, 128>}, {pipeline_mode = #tpu.pipeline_mode<synchronous>, transform_indices = @transform_2, window_bounds = array<i64: 1, 128>}, {pipeline_mode = #tpu.pipeline_mode<synchronous>, transform_indices = @transform_3, window_bounds = array<i64: 1, 128>}, {transform_indices = @transform_4, window_bounds = array<i64: 1, 1>}, {transform_indices = @transform_5, window_bounds = array<i64: 16, 1>}]} {
    %c0 = arith.constant 0 : index
    %c0_0 = arith.constant 0 : index
    %0 = vector.load %arg1[%c0, %c0_0] : memref<16x32xf32, #tpu.memory_space<vmem>>, vector<16x32xf32>
    %1 = arith.truncf %0 : vector<16x32xf32> to vector<16x32xbf16>
    %c0_1 = arith.constant 0 : index
    %c0_2 = arith.constant 0 : index
    %2 = vector.load %arg2[%c0_1, %c0_2] : memref<32x128xf32, #tpu.memory_space<vmem>>, vector<32x128xf32>
    %3 = arith.truncf %2 : vector<32x128xf32> to vector<32x128xbf16>
    %cst = arith.constant dense<0.000000e+00> : vector<16x128xf32>
    %4 = tpu.matmul %1, %3, %cst {dimension_numbers = #tpu.dot_dimension_numbers<[1], [0], [0], [1], [0, 0, 1, 1], [], []>} : vector<16x32xbf16>, vector<32x128xbf16>, vector<16x128xf32> -> vector<16x128xf32>
    %c0_3 = arith.constant 0 : index
    %c0_4 = arith.constant 0 : index
    %5 = vector.load %arg3[%c0_3, %c0_4] : memref<1x128xf32, #tpu.memory_space<vmem>>, vector<1x128xf32>
    %6 = vector.broadcast %5 : vector<1x128xf32> to vector<16x128xf32>
    %7 = arith.addf %4, %6 : vector<16x128xf32>
    %cst_5 = arith.constant 0.000000e+00 : f32
    %8 = vector.broadcast %cst_5 : f32 to vector<16x128xf32>
    %9 = arith.maximumf %7, %8 : vector<16x128xf32>
    %c0_6 = arith.constant 0 : index
    %c0_7 = arith.constant 0 : index
    %10 = vector.load %arg4[%c0_6, %c0_7] : memref<1x128xf32, #tpu.memory_space<vmem>>, vector<1x128xf32>
    %11 = vector.broadcast %10 : vector<1x128xf32> to vector<16x128xf32>
    %12 = arith.mulf %9, %11 : vector<16x128xf32>
    %cst_8 = arith.constant dense<0.000000e+00> : vector<16xf32>
    %13 = vector.multi_reduction <add>, %12, %cst_8 [1] : vector<16x128xf32> to vector<16xf32>
    %14 = vector.shape_cast %13 : vector<16xf32> to vector<16x1xf32>
    %c0_9 = arith.constant 0 : index
    %c0_10 = arith.constant 0 : index
    %15 = memref.load %arg5[%c0_9, %c0_10] : memref<1x1xf32, #tpu.memory_space<smem>>
    %16 = vector.broadcast %15 : f32 to vector<16x1xf32>
    %17 = arith.addf %14, %16 : vector<16x1xf32>
    %c0_11 = arith.constant 0 : index
    %c0_12 = arith.constant 0 : index
    %18 = vector.load %arg6[%c0_11, %c0_12] : memref<16x1xf32, #tpu.memory_space<vmem>>, vector<16x1xf32>
    tpu.vector_store %arg6[%c0_11, %c0_12], %17 {strides = array<i32>} : memref<16x1xf32, #tpu.memory_space<vmem>>, vector<16x1xf32>,
    return
  }
  func.func @transform_0(%arg0: i32) -> (i32, i32) {
    %c0_i32 = arith.constant 0 : i32
    %c0_i32_0 = arith.constant 0 : i32
    return %arg0, %c0_i32 : i32, i32
  }
  func.func @transform_1(%arg0: i32) -> (i32, i32) {
    %c0_i32 = arith.constant 0 : i32
    %c0_i32_0 = arith.constant 0 : i32
    %c0_i32_1 = arith.constant 0 : i32
    return %c0_i32, %c0_i32_0 : i32, i32
  }
  func.func @transform_2(%arg0: i32) -> (i32, i32) {
    %c0_i32 = arith.constant 0 : i32
    %c0_i32_0 = arith.constant 0 : i32
    %c0_i32_1 = arith.constant 0 : i32
    return %c0_i32, %c0_i32_0 : i32, i32
  }
  func.func @transform_3(%arg0: i32) -> (i32, i32) {
    %c0_i32 = arith.constant 0 : i32
    %c0_i32_0 = arith.constant 0 : i32
    %c0_i32_1 = arith.constant 0 : i32
    return %c0_i32, %c0_i32_0 : i32, i32
  }
  func.func @transform_4(%arg0: i32) -> (i32, i32) {
    %c0_i32 = arith.constant 0 : i32
    %c0_i32_0 = arith.constant 0 : i32
    %c0_i32_1 = arith.constant 0 : i32
    return %c0_i32, %c0_i32_0 : i32, i32
  }
  func.func @transform_5(%arg0: i32) -> (i32, i32) {
    %c0_i32 = arith.constant 0 : i32
    %c0_i32_0 = arith.constant 0 : i32
    return %arg0, %c0_i32 : i32, i32
  }
}

</mosaic_0001>

<llo_original>
// kernel: tpu_custom_call.1
$region0: #{tpu_custom_call.1}
  #allocation0 [shape = 'u32[]', space=smem, size = 0x4, offset = 0x4, fixed_abs, tag = 'smem constant byte address 0x4 - core index']
  #allocation1 [shape = 'u32[72,128]{1,0:T(1,128)}', space=vmem, size = 0x9000, scoped, tag = 'internal scratch']
  #allocation2 [shape = 'f32[1,1]{1,0:T(1,128)S(6)}', space=smem, size = 0x200, scoped, tag = 'scoped memory for tpu_custom_call.1']
  %s0 = inlined_call_operand.vmem [shape: f32[2,32], index: 0, kind: input, shape index: {}]
  %s1 = inlined_call_operand.hbm [shape: f32[32,128], index: 1, kind: input, shape index: {}]
  %s2 = inlined_call_operand.vmem [shape: f32[1,128], index: 2, kind: input, shape index: {}]
  %s3 = inlined_call_operand.vmem [shape: f32[1,128], index: 3, kind: input, shape index: {}]
  %s4 = inlined_call_operand.<no memory space> [shape: f32[1,1], index: 4, kind: input, shape index: {}]
  %s5 = inlined_call_operand.vmem [shape: f32[2,1], index: 5, kind: output, shape index: {}]
  %s6 = sld [smem:[#allocation0]]
  $region64: #{tpu_custom_call.1} parent=0
    _
  %s8 = ssub.s32 1, %s6
  %s9 = scalar_select 0, %s8, %s6
  %10 = sst [smem:[#allocation2]] %s4
  $region1: #{tpu_custom_call.1} parent=0
    #allocation3 [shape = 'u8[16384]{0}', space=vmem, size = 0x4000, scoped, tag = 'input window, operand 1, single buffered']
    #allocation4 [shape = 's32[1]{0}', space=sflag, size = 0x4, scoped, tag = 'scoped memory for tpu_custom_call.1']
    #allocation5 [shape = 'u8[8192]{0}', space=vmem, size = 0x2000, scoped, tag = 'output window, operand 0, single buffered']
    %11 = vsyncpa [#allocation4], 0
    // Predicated region
    $region2: #{tpu_custom_call.1} parent=1 // pred_check
      _
    $region3: #{tpu_custom_call.1} parent=1 // pred_check_branch
      %13 = sbr.rel (0) target = $region5
    $region4: #{tpu_custom_call.1} parent=1 // pred_region
      _
    $region5: #{tpu_custom_call.1} parent=1 // pred_fallthru
      _
    // Predicated region
    $region6: #{tpu_custom_call.1} parent=1 // pred_check
      _
    $region7: #{tpu_custom_call.1} parent=1 // pred_check_branch
      %15 = sbr.rel (0) target = $region9
    $region8: #{tpu_custom_call.1} parent=1 // pred_region
      %17 = vsyncadd [#allocation4], 0
      %s18 = sshll.u32 %s1, 4
      %s19 = int_to_ptr.hbm [resolvable:$true] %s18
      %s20 = sshll.u32 [#allocation3], 4
      %s21 = int_to_ptr.vmem [resolvable:$true] %s20
      %26 = dma.hbm_to_vmem [thread:$0]  %s19, 512, %s21, [#allocation4], 128, 128, 8
    $region9: #{tpu_custom_call.1} parent=1 // pred_fallthru
      _
    // Predicated region
    $region10: #{tpu_custom_call.1} parent=1 // pred_check
      _
    $region11: #{tpu_custom_call.1} parent=1 // pred_check_branch
      %28 = sbr.rel (0) target = $region13
    $region12: #{tpu_custom_call.1} parent=1 // pred_region
      _
    $region13: #{tpu_custom_call.1} parent=1 // pred_fallthru
      _
    // Predicated region
    $region14: #{tpu_custom_call.1} parent=1 // pred_check
      _
    $region15: #{tpu_custom_call.1} parent=1 // pred_check_branch
      %30 = sbr.rel (0) target = $region17
    $region16: #{tpu_custom_call.1} parent=1 // pred_region
      _
    $region17: #{tpu_custom_call.1} parent=1 // pred_fallthru
      _
    // Predicated region
    $region18: #{tpu_custom_call.1} parent=1 // pred_check
      _
    $region19: #{tpu_custom_call.1} parent=1 // pred_check_branch
      %32 = sbr.rel (0) target = $region21
    $region20: #{tpu_custom_call.1} parent=1 // pred_region
      _
    $region21: #{tpu_custom_call.1} parent=1 // pred_fallthru
      _
    // Predicated region
    $region22: #{tpu_custom_call.1} parent=1 // pred_check
      _
    $region23: #{tpu_custom_call.1} parent=1 // pred_check_branch
      %34 = sbr.rel (0) target = $region25
    $region24: #{tpu_custom_call.1} parent=1 // pred_region
      %36 = dma.done [#allocation4], 512
    $region25: #{tpu_custom_call.1} parent=1 // pred_fallthru
      _
    %v38 = vld [vmem:[%s0] sm:$0xff]
    %v39 = vld [vmem:[%s0 + $0x8] sm:$0xff]
    %v40 = vpack.c.bf16 %v39, %v38
    %v41 = vld [vmem:[#allocation3] sm:$0xff]
    %v42 = vld [vmem:[#allocation3 + $0x8] sm:$0xff]
    %v43 = vld [vmem:[#allocation3 + $0x10] sm:$0xff]
    %v44 = vld [vmem:[#allocation3 + $0x18] sm:$0xff]
    %v45 = vpack.c.bf16 %v42, %v41
    %v46 = vpack.c.bf16 %v44, %v43
    %v47 = vld [vmem:[%s2] sm:$0x1]
    %v49 = vperm.slane %v47, 0
    %vm51 = vcmask 261120
    %v53 = vsel %vm51, %v40, 0
    %55 = vmatpush.bf16.msra.mxu0 0
    %56 = vmatpush.bf16.msra.mxu0 0
    %57 = vmatpush.bf16.msra.mxu0 0
    %58 = vmatpush.bf16.msra.mxu0 0
    %59 = vmatpush.bf16.msra.mxu0 0
    %60 = vmatpush.bf16.msra.mxu0 0
    %61 = vmatpush.bf16.msra.mxu0 %v46
    %62 = vmatpush.bf16.msra.mxu0 %v45
    %63 = vmatmul.bf16.gmra.mxu0 %v53
    %v64 = vpop.f32.mrf.mxu0
    %v65 = vadd.f32 %v49, %v64
    %v66 = vpop.f32.mrf.mxu0
    %v67 = vadd.f32 %v49, %v66
    %68 = vdwg.mxu0
    %v69 = vmax.f32 %v65, 0.0
    %v70 = vmax.f32 %v67, 0.0
    %v71 = vld [vmem:[%s3] sm:$0x1]
    %v73 = vperm.slane %v71, 0
    %v75 = vmul.f32 %v69, %v73
    %v76 = vmul.f32 %v70, %v73
    %77 = vadd.xlane.f32.xlu0 %v75
    %v78 = vpop.xlane.xlu0 %77
    %79 = vadd.xlane.f32.xlu0 %v76
    %v80 = vpop.xlane.xlu0 %79
    %s81 = sld [smem:[#allocation2]]
    %v82 = vstv %s81
    %v83 = vadd.f32 %v78, %v82
    %v84 = vadd.f32 %v80, %v82
    %vm85 = vcmask 7168
    %86 = vst.msk [vmem:[#allocation5] sm:$0xff] %vm85, %v83
    %87 = vst.msk [vmem:[#allocation5 + $0x8] sm:$0xff] %vm85, %v84
    // Predicated region
    $region26: #{tpu_custom_call.1} parent=1 // pred_check
      _
    $region27: #{tpu_custom_call.1} parent=1 // pred_check_branch
      %89 = sbr.rel (0) target = $region29
    $region28: #{tpu_custom_call.1} parent=1 // pred_region
      // Predicated region
      $region30: #{tpu_custom_call.1} parent=28 // pred_check
        _
      $region31: #{tpu_custom_call.1} parent=28 // pred_check_branch
        %91 = sbr.rel (0) target = $region33
      $region32: #{tpu_custom_call.1} parent=28 // pred_region
        // Predicated region
        $region34: #{tpu_custom_call.1} parent=32 // pred_check
          _
        $region35: #{tpu_custom_call.1} parent=32 // pred_check_branch
          %93 = sbr.rel target = $region37
        $region36: #{tpu_custom_call.1} parent=32 // pred_region
          // Predicated region
          $region49: #{tpu_custom_call.1} parent=36 // pred_check
            _
          $region50: #{tpu_custom_call.1} parent=36 // pred_check_branch
            %109 = sbr.rel (0) target = $region52
          $region51: #{tpu_custom_call.1} parent=36 // pred_region
            %s111 = ssub.s32 4, 1
            loop: start=0, step=1, limit=1
            $region53: #{tpu_custom_call.1} parent=51 // loop_pre_header
              _
            $region54: #{tpu_custom_call.1} parent=51 // loop_header
              %s113 = sphi 0, %s117
              %p114 = scmp.ge.s32.totalorder %s113, 1
              %s118 = sphi [#allocation5], [#allocation5]
              %s119 = sphi %s5, %s5
            $region55: #{tpu_custom_call.1} parent=51 // loop_header_branch
              %116 = sbr.rel (%p114) target = $region59
            $region56: #{tpu_custom_call.1} parent=51 // loop_body
              %v120 = vld [vmem:[%s118] sm:%s111]
              %121 = vst [vmem:[%s119] sm:%s111] %v120
            $region57: #{tpu_custom_call.1} parent=51 // loop_footer
              %s117 = sadd.s32 1, %s113
            $region58: #{tpu_custom_call.1} parent=51 // loop_footer_branch
              %112 = sbr.rel target = $region54
            $region59: #{tpu_custom_call.1} parent=51 // loop_exit
              _
          $region52: #{tpu_custom_call.1} parent=36 // pred_fallthru
            _
        $region37: #{tpu_custom_call.1} parent=32 // pred_fallthru
          _
        // Predicated region
        $region38: #{tpu_custom_call.1} parent=32 // pred_check
          _
        $region39: #{tpu_custom_call.1} parent=32 // pred_check_branch
          %95 = sbr.rel (0) target = $region41
        $region40: #{tpu_custom_call.1} parent=32 // pred_region
          %s97 = ssub.s32 4, 1
          loop: start=0, step=1, limit=1
          $region42: #{tpu_custom_call.1} parent=40 // loop_pre_header
            _
          $region43: #{tpu_custom_call.1} parent=40 // loop_header
            %s99 = sphi 0, %s103
            %p100 = scmp.ge.s32.totalorder %s99, 1
            %s104 = sphi [#allocation5], [#allocation5]
            %s105 = sphi %s5, %s5
          $region44: #{tpu_custom_call.1} parent=40 // loop_header_branch
            %102 = sbr.rel (%p100) target = $region48
          $region45: #{tpu_custom_call.1} parent=40 // loop_body
            %v106 = vld [vmem:[%s104] sm:%s97]
            %107 = vst [vmem:[%s105] sm:%s97] %v106
          $region46: #{tpu_custom_call.1} parent=40 // loop_footer
            %s103 = sadd.s32 1, %s99
          $region47: #{tpu_custom_call.1} parent=40 // loop_footer_branch
            %98 = sbr.rel target = $region43
          $region48: #{tpu_custom_call.1} parent=40 // loop_exit
            _
        $region41: #{tpu_custom_call.1} parent=32 // pred_fallthru
          _
      $region33: #{tpu_custom_call.1} parent=28 // pred_fallthru
        _
      %122 = vnop
    $region29: #{tpu_custom_call.1} parent=1 // pred_fallthru
      _
    // Predicated region
    $region60: #{tpu_custom_call.1} parent=1 // pred_check
      _
    $region61: #{tpu_custom_call.1} parent=1 // pred_check_branch
      %124 = sbr.rel (0) target = $region63
    $region62: #{tpu_custom_call.1} parent=1 // pred_region
      _
    $region63: #{tpu_custom_call.1} parent=1 // pred_fallthru
      _
    %125 = vsyncpa [#allocation4], 1

</llo_original>
